<compile_context>
chip_gen: v7x
topology: tpu7x:2x2x1
jax: 0.10.0
libtpu: 0.0.40
codegen_flags: <defaults>
</compile_context>

<pallas_src>
import jax
import jax.numpy as jnp
from jax.experimental import pallas as pl
from jax.experimental.pallas import tpu as pltpu


def _lin_reg_kernel(wb_ref, x_ref, o_ref):
    # wb_ref: (2,) float32 scalars in SMEM (scalar prefetch) -> [w, b].
    # x_ref / o_ref: (tile_rows, lanes) lane-dense tiles in VMEM.
    w = wb_ref[0]
    b = wb_ref[1]
    xv = x_ref[...].astype(jnp.float32)            # f32 compute (v5e bf16-safe)
    o_ref[...] = (xv * w + b).astype(o_ref.dtype)  # full-width unmasked stores


def _default_tile_rows(lanes: int, itemsize: int) -> int:
    """Per-step tile targeting ~4 MiB (v5e/v6e) or ~8 MiB (v7x) blocks."""
    try:
        kind = jax.devices()[0].device_kind.lower()
    except Exception:  # pragma: no cover - defensive, never expected on TPU
        kind = ""
    tile_bytes = (8 << 20) if ("v7" in kind or "7x" in kind) else (4 << 20)
    return max(8, tile_bytes // (lanes * max(itemsize, 1)))


def lin_reg_forward(x: jax.Array, weight: jax.Array, bias: jax.Array, *,
                    min_pallas_elems: int = 16384,
                    lanes: int = 512,
                    tile_rows: int | None = None) -> jax.Array:
    """y = x @ weight.T + bias  with weight (1,1), bias (1,), x (N,1)."""
    n, in_f = x.shape
    assert in_f == 1 and weight.shape == (1, 1) and bias.shape == (1,)
    assert lanes % 128 == 0
    out_dtype = x.dtype
    itemsize = jnp.dtype(x.dtype).itemsize
    sublane = {4: 8, 2: 16, 1: 32}.get(itemsize, 8)   # rows per packed vreg

    w32 = weight.astype(jnp.float32).reshape(1)
    b32 = bias.astype(jnp.float32).reshape(1)
    wb = jnp.concatenate([w32, b32])                  # (2,) scalar-prefetch payload

    def xla_path(xs):
        return (xs.astype(jnp.float32) * w32[0] + b32[0]).astype(out_dtype)

    rows = n // lanes
    # Small batches: launch / per-step overhead >> the handful of FLOPs.
    if n < min_pallas_elems or rows == 0:
        return xla_path(x)

    if tile_rows is None:
        tile_rows = _default_tile_rows(lanes, itemsize)

    # Bulk/tail split: the Pallas call only sees the exact multiple-of-`lanes`
    # prefix (free bitcast-reshape when tail == 0).  No pad / un-pad passes.
    bulk = rows * lanes
    tail = n - bulk                                   # < lanes elements

    x_flat = x.reshape(n)                             # (n,1) -> (n,) free bitcast
    x2d = x_flat[:bulk].reshape(rows, lanes)          # lane-dense bulk view

    if rows <= tile_rows:
        tr = rows                                     # single full-extent block
    else:
        tr = max((tile_rows // sublane) * sublane, sublane)  # packed block rows
    num_blocks = pl.cdiv(rows, tr)                    # last block may be ragged

    # TODO(synk): on v7x, verify in the Mosaic dump that "parallel" actually
    # shards this axis across both TensorCores; otherwise use CORE_PARALLEL.
    y2d = pl.pallas_call(
        _lin_reg_kernel,
        out_shape=jax.ShapeDtypeStruct((rows, lanes), out_dtype),
        grid_spec=pltpu.PrefetchScalarGridSpec(
            num_scalar_prefetch=1,
            grid=(num_blocks,),
            in_specs=[pl.BlockSpec((tr, lanes), lambda i, wb_ref: (i, 0))],
            out_specs=pl.BlockSpec((tr, lanes), lambda i, wb_ref: (i, 0)),
        ),
        compiler_params=pltpu.CompilerParams(
            dimension_semantics=("parallel",),
            vmem_limit_bytes=48 << 20,
        ),
    )(wb, x2d)

    y_bulk = y2d.reshape(bulk, 1)                     # free bitcast back to column
    if tail == 0:
        return y_bulk
    y_tail = xla_path(x_flat[bulk:].reshape(tail, 1))
    return jnp.concatenate([y_bulk, y_tail], axis=0)


if __name__ == "__main__":
    key = jax.random.PRNGKey(0)
    k_w, k_b, k_x1, k_x2, k_x3, k_x4 = jax.random.split(key, 6)

    # nn.Linear(1, 1) init: U(-1/sqrt(in_features), 1/sqrt(in_features)) = U(-1, 1).
    weight = jax.random.uniform(k_w, (1, 1), jnp.float32, minval=-1.0, maxval=1.0)
    bias = jax.random.uniform(k_b, (1,), jnp.float32, minval=-1.0, maxval=1.0)

    def ref(x):
        return x @ weight.T + bias

    # 1) Tiny batch -> XLA fast path (no Pallas launch).
    x_small = jax.random.normal(k_x1, (8, 1), jnp.float32)
    y_small = lin_reg_forward(x_small, weight, bias)
    jax.block_until_ready(y_small)
    assert y_small.shape == (8, 1)
    assert jnp.allclose(y_small, ref(x_small), atol=1e-6), "small-batch mismatch"

    # 2) Exact multiple of the lane width: zero-copy bulk path, single block.
    x_a = jax.random.normal(k_x2, (2048, 1), jnp.float32)
    y_a = lin_reg_forward(x_a, weight, bias, min_pallas_elems=0)
    jax.block_until_ready(y_a)
    assert y_a.shape == (2048, 1)
    assert jnp.allclose(y_a, ref(x_a), atol=1e-6), "pallas (exact) mismatch"

    # 3) Non-multiple batch: Pallas bulk + tiny XLA tail (< 512 elems).
    x_b = jax.random.normal(k_x3, (3000, 1), jnp.float32)
    y_b = lin_reg_forward(x_b, weight, bias, min_pallas_elems=0)
    jax.block_until_ready(y_b)
    assert y_b.shape == (3000, 1)
    assert jnp.allclose(y_b, ref(x_b), atol=1e-6), "pallas (bulk+tail) mismatch"

    # 4) Multi-step grid with a ragged last row block (small tiles only for the
    #    test; production defaults are ~4 MiB blocks, ~8 MiB on v7x).
    x_c = jax.random.normal(k_x4, (10000, 1), jnp.float32)
    y_c = lin_reg_forward(x_c, weight, bias, min_pallas_elems=0,
                          lanes=128, tile_rows=16)
    jax.block_until_ready(y_c)
    assert y_c.shape == (10000, 1)
    assert jnp.allclose(y_c, ref(x_c), atol=1e-6), "pallas (tiled) mismatch"

    print("KERNEL_OK")
</pallas_src>

<mosaic_0001>
module attributes {stable_mosaic.version = 11 : i64} {
  func.func @_lin_reg_kernel(%arg0: i32, %arg1: memref<2xf32, #tpu.memory_space<smem>>, %arg2: memref<4x512xf32, #tpu.memory_space<vmem>>, %arg3: memref<4x512xf32, #tpu.memory_space<vmem>>) attributes {dimension_semantics = [#tpu.dimension_semantics<parallel>], iteration_bounds = array<i64: 1>, scalar_prefetch = 1 : i64, scratch_operands = 0 : i64, tpu.core_type = #tpu.core_type<tc>, window_params = [{transform_indices = @transform_0, window_bounds = array<i64: 4, 512>}, {transform_indices = @transform_1, window_bounds = array<i64: 4, 512>}]} {
    %c0 = arith.constant 0 : index
    %0 = memref.load %arg1[%c0] : memref<2xf32, #tpu.memory_space<smem>>
    %c1 = arith.constant 1 : index
    %1 = memref.load %arg1[%c1] : memref<2xf32, #tpu.memory_space<smem>>
    %c0_0 = arith.constant 0 : index
    %c0_1 = arith.constant 0 : index
    %2 = vector.load %arg2[%c0_0, %c0_1] : memref<4x512xf32, #tpu.memory_space<vmem>>, vector<4x512xf32>
    %3 = vector.broadcast %0 : f32 to vector<4x512xf32>
    %4 = arith.mulf %2, %3 : vector<4x512xf32>
    %5 = vector.broadcast %1 : f32 to vector<4x512xf32>
    %6 = arith.addf %4, %5 : vector<4x512xf32>
    %c0_2 = arith.constant 0 : index
    %c0_3 = arith.constant 0 : index
    %7 = vector.load %arg3[%c0_2, %c0_3] : memref<4x512xf32, #tpu.memory_space<vmem>>, vector<4x512xf32>
    tpu.vector_store %arg3[%c0_2, %c0_3], %6 {strides = array<i32>} : memref<4x512xf32, #tpu.memory_space<vmem>>, vector<4x512xf32>,
    return
  }
  func.func @transform_0(%arg0: i32, %arg1: memref<2xf32, #tpu.memory_space<smem>>) -> (i32, i32) {
    %c0_i32 = arith.constant 0 : i32
    %c0_i32_0 = arith.constant 0 : i32
    return %arg0, %c0_i32 : i32, i32
  }
  func.func @transform_1(%arg0: i32, %arg1: memref<2xf32, #tpu.memory_space<smem>>) -> (i32, i32) {
    %c0_i32 = arith.constant 0 : i32
    %c0_i32_0 = arith.constant 0 : i32
    return %arg0, %c0_i32 : i32, i32
  }
}

</mosaic_0001>

<llo_original>
// kernel: tpu_custom_call.1
$region0: #{tpu_custom_call.1}
  #allocation0 [shape = 'u32[]', space=smem, size = 0x4, offset = 0x4, fixed_abs, tag = 'smem constant byte address 0x4 - core index']
  #allocation1 [shape = 'u32[144,128]{1,0:T(1,128)}', space=vmem, size = 0x12000, scoped, tag = 'internal scratch']
  #allocation2 [shape = 's32[1]{0}', space=sflag, size = 0x4, scoped, tag = 'scoped memory for tpu_custom_call.1']
  #allocation3 [shape = 'u8[512]{0}', space=smem, size = 0x200, scoped, tag = 'prefetched SMEM operand 0']
  %s0 = inlined_call_operand.hbm [shape: f32[2], index: 0, kind: input, shape index: {}]
  %s1 = inlined_call_operand.hbm [shape: f32[4,512], index: 1, kind: input, shape index: {}]
  %s2 = inlined_call_operand.hbm [shape: f32[4,512], index: 2, kind: output, shape index: {}]
  %s3 = sld [smem:[#allocation0]]
  $region18: #{tpu_custom_call.1} parent=0
    _
  %s5 = ssub.s32 1, %s3
  %s6 = scalar_select 0, %s5, %s3
  %8 = dma.hbm_to_smem %s0, 16, [#allocation3], [#allocation2]
  %9 = dma.done [#allocation2], 16
  %10 = sfence
  $region1: #{tpu_custom_call.1} parent=0
    #allocation4 [shape = 'u8[8192]{0}', space=vmem, size = 0x2000, scoped, tag = 'input window, operand 1, single buffered']
    #allocation5 [shape = 's32[1]{0}', space=sflag, size = 0x4, scoped, tag = 'scoped memory for tpu_custom_call.1']
    #allocation6 [shape = 's32[1]{0}', space=sflag, size = 0x4, scoped, tag = 'scoped memory for tpu_custom_call.1']
    #allocation7 [shape = 'u8[8192]{0}', space=vmem, size = 0x2000, scoped, tag = 'output window, operand 0, single buffered']
    %11 = vsyncpa [#allocation5], 0
    %12 = vsyncpa [#allocation6], 0
    // Predicated region
    $region2: #{tpu_custom_call.1} parent=1 // pred_check
      _
    $region3: #{tpu_custom_call.1} parent=1 // pred_check_branch
      %14 = sbr.rel (0) target = $region5
    $region4: #{tpu_custom_call.1} parent=1 // pred_region
      %s16 = ssub.s32 256, 256
      %17 = vsyncadd [#allocation5], %s16
      %s19 = sshll.u32 [#allocation4], 4
      %s20 = int_to_ptr.vmem [resolvable:$true] %s19
      %22 = dma.hbm_to_vmem [thread:$0]  %s1, 256, %s20, [#allocation5]
    $region5: #{tpu_custom_call.1} parent=1 // pred_fallthru
      _
    // Predicated region
    $region6: #{tpu_custom_call.1} parent=1 // pred_check
      _
    $region7: #{tpu_custom_call.1} parent=1 // pred_check_branch
      %24 = sbr.rel (0) target = $region9
    $region8: #{tpu_custom_call.1} parent=1 // pred_region
      %25 = dma.done [#allocation5], 256
    $region9: #{tpu_custom_call.1} parent=1 // pred_fallthru
      _
    %s26 = sld [smem:[#allocation3]]
    %s27 = sld [smem:[#allocation3 + $0x1]]
    %v28 = vld [vmem:[#allocation4] sm:$0xff]
    %v29 = vld [vmem:[#allocation4 + $0x8] sm:$0xff]
    %v30 = vstv %s26
    %v31 = vmul.f32 %v28, %v30
    %v32 = vmul.f32 %v29, %v30
    %v33 = vstv %s27
    %v34 = vadd.f32 %v31, %v33
    %v35 = vadd.f32 %v32, %v33
    %36 = vst [vmem:[#allocation7] sm:$0xff] %v34
    %37 = vst [vmem:[#allocation7 + $0x8] sm:$0xff] %v35
    // Predicated region
    $region10: #{tpu_custom_call.1} parent=1 // pred_check
      _
    $region11: #{tpu_custom_call.1} parent=1 // pred_check_branch
      %39 = sbr.rel (0) target = $region13
    $region12: #{tpu_custom_call.1} parent=1 // pred_region
      %s41 = ssub.s32 256, 256
      %42 = vsyncadd [#allocation6], %s41
      %s44 = sshll.u32 [#allocation7], 4
      %s45 = int_to_ptr.vmem [resolvable:$true] %s44
      %47 = dma.vmem_to_hbm [thread:$0]  %s45, 256, %s2, [#allocation6]
    $region13: #{tpu_custom_call.1} parent=1 // pred_fallthru
      _
    // Predicated region
    $region14: #{tpu_custom_call.1} parent=1 // pred_check
      _
    $region15: #{tpu_custom_call.1} parent=1 // pred_check_branch
      %49 = sbr.rel (0) target = $region17
    $region16: #{tpu_custom_call.1} parent=1 // pred_region
      %50 = dma.done [#allocation6], 256
    $region17: #{tpu_custom_call.1} parent=1 // pred_fallthru
      _
    %51 = vsyncpa [#allocation5], 1
    %52 = vsyncpa [#allocation6], 1

</llo_original>
